<compile_context>
chip_gen: v6e
topology: v6e:2x2x1
jax: 0.10.0
libtpu: 0.0.40
codegen_flags: <defaults>
</compile_context>

<pallas_src>
import functools
import math

import jax
import jax.numpy as jnp
from jax.experimental import pallas as pl
from jax.experimental.pallas import tpu as pltpu


def _round_up(x, m):
    return -(-x // m) * m


def _round_down(x, m):
    return (x // m) * m


def _act_fn(name):
    if name == "gelu":                                  # HF/PyTorch exact GELU
        inv_sqrt2 = 1.0 / math.sqrt(2.0)
        return lambda h: 0.5 * h * (1.0 + jax.lax.erf(h * inv_sqrt2))
    if name in ("gelu_new", "gelu_pytorch_tanh"):       # tanh approximation
        c = math.sqrt(2.0 / math.pi)
        return lambda h: 0.5 * h * (1.0 + jnp.tanh(c * (h + 0.044715 * h * h * h)))
    if name == "relu":
        return lambda h: jnp.maximum(h, 0.0)
    # TODO(synk): other ACT2FN entries (silu, gelu_10, ...) not wired up.
    raise ValueError(f"unsupported hidden_act: {name}")


def _epilogue(h, b_ref, gamma_ref, beta_ref, out_ref, act, eps):
    """h: [tm, H] f32 pre-bias dense output -> bias, activation, LayerNorm, store."""
    h = h + b_ref[...].astype(jnp.float32)
    h = act(h)
    # LayerNorm (biased variance, torch semantics) via E[h^2] - mean^2 so the two
    # lane reductions read the same h and no `centered` pass is materialized first.
    mean = jnp.mean(h, axis=-1, keepdims=True)
    msq = jnp.mean(h * h, axis=-1, keepdims=True)
    var = jnp.maximum(msq - mean * mean, 0.0)
    h = (h - mean) * jax.lax.rsqrt(var + eps)
    h = h * gamma_ref[...].astype(jnp.float32) + beta_ref[...].astype(jnp.float32)
    out_ref[...] = h.astype(out_ref.dtype)


def _make_simple_kernel(eps, act_name):
    """Weight fully VMEM-resident: single grid axis over row tiles."""
    act = _act_fn(act_name)

    def kernel(x_ref, w_ref, b_ref, gamma_ref, beta_ref, out_ref):
        h = jnp.dot(x_ref[...], w_ref[...], preferred_element_type=jnp.float32)
        _epilogue(h, b_ref, gamma_ref, beta_ref, out_ref, act, eps)

    return kernel


def _make_ktiled_kernel(eps, act_name):
    """Weight streamed in (tk, H) slabs along a K grid axis; f32 accumulator scratch."""
    act = _act_fn(act_name)

    def kernel(x_ref, w_ref, b_ref, gamma_ref, beta_ref, out_ref, acc_ref):
        k = pl.program_id(1)

        @pl.when(k == 0)
        def _():
            acc_ref[...] = jnp.zeros_like(acc_ref)

        acc_ref[...] += jnp.dot(x_ref[...], w_ref[...],
                                preferred_element_type=jnp.float32)

        @pl.when(k == pl.num_programs(1) - 1)
        def _():
            _epilogue(acc_ref[...], b_ref, gamma_ref, beta_ref, out_ref, act, eps)

    return kernel


def _largest_k_tile(H, tk_max):
    """Largest multiple of 128 that divides H and is <= tk_max (0 if none exists)."""
    tk_max = min(tk_max, H)
    best, c = 0, 128
    while c <= tk_max:
        if H % c == 0:
            best = c
        c += 128
    return best


def _derive_tiles(M, H, x_bytes, out_bytes, w_bytes, budget, tm=None, tk=None):
    vec_bytes = 3 * 2 * H * 4                       # bias/gamma/beta vectors (generous)
    # Per output-row working set: double-buffered x & out streams + ~4 f32 [., H]
    # working buffers (dot result / activation temporaries / accumulator).
    per_row = 2 * H * x_bytes + 2 * H * out_bytes + 4 * H * 4
    resident_w = H * H * w_bytes                    # single-buffered (constant index map)

    if tk is None:
        if resident_w + vec_bytes + 128 * per_row <= budget:
            tk = H                                  # weight fully VMEM-resident
        else:
            # K-tiled fallback: stream (tk, H) weight slabs.
            tm_k = tm if tm is not None else min(256, _round_up(M, 8))
            remaining = budget - vec_bytes - tm_k * H * 4 - 2 * tm_k * H * out_bytes
            per_k = 2 * H * w_bytes + 2 * tm_k * x_bytes
            tk = _largest_k_tile(H, max(int(remaining // max(per_k, 1)), 128))
            if tk == 0:
                # No 128-aligned divisor of H: fall back to the resident path.
                # TODO(synk): pad/mask the partial K slab for such exotic H.
                tk = H
    elif tk >= H:
        tk = H

    if tm is None:
        if tk == H:
            avail = budget - resident_w - vec_bytes
            tm = int(avail // per_row)
        else:
            avail = budget - vec_bytes - 2 * tk * H * w_bytes
            tm = int(avail // (2 * tk * x_bytes + 2 * H * out_bytes + 4 * H * 4))
        tm = max(min(tm, 1024), 128)                # never below 128 (MXU underfill cliff)
        tm = _round_down(tm, 256) if tm >= 256 else 128

    if tm >= M:
        if M >= 512:
            # >=2 MXU-aligned row tiles so v7x megacore can split the parallel axis.
            tm = _round_up(-(-M // 2), 256)
        else:
            tm = M                                  # single full-extent block
    return tm, tk


def qbert_prediction_head_transform(x, params, *, eps=1e-12, hidden_act="gelu",
                                    matmul_dtype=jnp.bfloat16, tm=None, tk=None,
                                    single_buffer_constants=True,
                                    vmem_budget_bytes=None):
    """x: [batch, seq, hidden].  params: w [H, H] (= PyTorch weight^T), b, gamma, beta [H].
    Returns [batch, seq, hidden] in x.dtype.  When tk is auto-derived it divides H."""
    B, S, H = x.shape
    M = B * S
    w, b, gamma, beta = params["w"], params["b"], params["gamma"], params["beta"]
    out_dtype = x.dtype

    # Matmul operands in bf16 (native MXU rate); epilogue math stays f32.
    mm_dtype = jnp.dtype(matmul_dtype)
    x2d = x.reshape(M, H).astype(mm_dtype)
    w_mm = w.astype(mm_dtype)
    b_2d = b.reshape(1, H)
    gamma_2d = gamma.reshape(1, H)
    beta_2d = beta.reshape(1, H)

    x_bytes = x2d.dtype.itemsize
    w_bytes = w_mm.dtype.itemsize
    out_bytes = jnp.dtype(out_dtype).itemsize

    # VMEM budget from the actual generation (v5e/v6e 128 MiB, v7x 64 MiB per TC).
    try:
        cap = int(getattr(pltpu.get_tpu_info(), "vmem_capacity_bytes", 64 << 20))
    except Exception:
        cap = 64 << 20
    if vmem_budget_bytes is None:
        vmem_budget_bytes = int(cap * 0.70)

    tm, tk = _derive_tiles(M, H, x_bytes, out_bytes, w_bytes,
                           vmem_budget_bytes, tm=tm, tk=tk)
    nm = pl.cdiv(M, tm)
    nk = pl.cdiv(H, tk)

    # Explicit scoped-VMEM limit from the actual tile footprint (with headroom),
    # capped by the physical capacity of this generation.
    vec_bytes = 3 * 2 * H * 4
    w_buf = 1 if single_buffer_constants else 2
    if nk == 1:
        needed = (w_buf * H * H * w_bytes + vec_bytes
                  + tm * (2 * H * x_bytes + 2 * H * out_bytes + 4 * H * 4))
    else:
        needed = (2 * tk * H * w_bytes + vec_bytes
                  + tm * (2 * tk * x_bytes + 2 * H * out_bytes + 4 * H * 4))
    vmem_limit = int(min(cap - (4 << 20), max(32 << 20, 2 * needed)))

    const_kwargs = {}
    if single_buffer_constants:
        # Constant index map -> re-DMA is already skipped; Buffered(1) just frees VMEM.
        const_kwargs = dict(pipeline_mode=pl.Buffered(1))

    if nk == 1:
        kernel = _make_simple_kernel(eps, hidden_act)
        grid = (nm,)
        in_specs = [
            pl.BlockSpec((tm, H), lambda i: (i, 0)),                    # x row tile
            pl.BlockSpec((H, H), lambda i: (0, 0), **const_kwargs),     # dense weight (in,out)
            pl.BlockSpec((1, H), lambda i: (0, 0), **const_kwargs),     # dense bias
            pl.BlockSpec((1, H), lambda i: (0, 0), **const_kwargs),     # LN gamma
            pl.BlockSpec((1, H), lambda i: (0, 0), **const_kwargs),     # LN beta
        ]
        out_specs = pl.BlockSpec((tm, H), lambda i: (i, 0))
        scratch_shapes = []
        dim_sem = ("parallel",)
    else:
        kernel = _make_ktiled_kernel(eps, hidden_act)
        grid = (nm, nk)
        in_specs = [
            pl.BlockSpec((tm, tk), lambda i, k: (i, k)),                 # x (rows, K slab)
            pl.BlockSpec((tk, H), lambda i, k: (k, 0)),                  # weight K slab
            pl.BlockSpec((1, H), lambda i, k: (0, 0), **const_kwargs),   # dense bias
            pl.BlockSpec((1, H), lambda i, k: (0, 0), **const_kwargs),   # LN gamma
            pl.BlockSpec((1, H), lambda i, k: (0, 0), **const_kwargs),   # LN beta
        ]
        out_specs = pl.BlockSpec((tm, H), lambda i, k: (i, 0))
        scratch_shapes = [pltpu.VMEM((tm, H), jnp.float32)]
        dim_sem = ("parallel", "arbitrary")

    out = pl.pallas_call(
        kernel,
        out_shape=jax.ShapeDtypeStruct((M, H), out_dtype),
        grid_spec=pltpu.PrefetchScalarGridSpec(
            num_scalar_prefetch=0,
            grid=grid,
            in_specs=in_specs,
            out_specs=out_specs,
            scratch_shapes=scratch_shapes),
        compiler_params=pltpu.CompilerParams(
            dimension_semantics=dim_sem,
            vmem_limit_bytes=vmem_limit),
    )(x2d, w_mm, b_2d, gamma_2d, beta_2d)

    return out.reshape(B, S, H)


def init_params(key, hidden_size):
    k1, k2, k3, k4 = jax.random.split(key, 4)
    # BERT-style init; w stored as [in_features, out_features] (= torch weight^T).
    w = jax.random.normal(k1, (hidden_size, hidden_size), jnp.float32) * 0.02
    b = 0.1 * jax.random.normal(k2, (hidden_size,), jnp.float32)
    gamma = 1.0 + 0.1 * jax.random.normal(k3, (hidden_size,), jnp.float32)
    beta = 0.1 * jax.random.normal(k4, (hidden_size,), jnp.float32)
    return {"w": w, "b": b, "gamma": gamma, "beta": beta}


def _reference(x, p, eps=1e-12, matmul_dtype=jnp.bfloat16):
    mm = jnp.dtype(matmul_dtype)
    h = jnp.einsum("bsh,hk->bsk", x.astype(mm), p["w"].astype(mm),
                   preferred_element_type=jnp.float32) + p["b"]
    h = 0.5 * h * (1.0 + jax.lax.erf(h / jnp.sqrt(2.0)))
    mean = jnp.mean(h, axis=-1, keepdims=True)
    var = jnp.mean((h - mean) ** 2, axis=-1, keepdims=True)
    out = (h - mean) / jnp.sqrt(var + eps) * p["gamma"] + p["beta"]
    return out.astype(x.dtype)


if __name__ == "__main__":
    layer_norm_eps = 1e-12
    key = jax.random.PRNGKey(0)
    kx, kp, kx2, kp2 = jax.random.split(key, 4)

    def run(xv, pv, **kw):
        fn = jax.jit(functools.partial(qbert_prediction_head_transform,
                                       eps=layer_norm_eps, hidden_act="gelu", **kw))
        return jax.block_until_ready(fn(xv, pv))

    # Case 1: module-consistent small shape, resident-weight (nk == 1) path.
    batch, seq, hidden = 2, 8, 32
    x = jax.random.normal(kx, (batch, seq, hidden), jnp.float32)
    params = init_params(kp, hidden)

    try:
        out = run(x, params, single_buffer_constants=True)
        sb = True
    except Exception:
        # This jax build rejects pipeline_mode=pl.Buffered(1); use default buffering.
        out = run(x, params, single_buffer_constants=False)
        sb = False

    ref = _reference(x, params, eps=layer_norm_eps)
    assert out.shape == (batch, seq, hidden)
    assert jnp.allclose(out, ref, atol=5e-4, rtol=5e-4), \
        float(jnp.max(jnp.abs(out - ref)))

    # Case 2: force the K-tiled (weight-streaming) path on a small shape.
    batch2, seq2, hidden2 = 2, 64, 256
    x2 = jax.random.normal(kx2, (batch2, seq2, hidden2), jnp.float32)
    params2 = init_params(kp2, hidden2)
    out2 = run(x2, params2, single_buffer_constants=sb, tm=64, tk=128)
    ref2 = _reference(x2, params2, eps=layer_norm_eps)
    assert out2.shape == (batch2, seq2, hidden2)
    assert jnp.allclose(out2, ref2, atol=5e-4, rtol=5e-4), \
        float(jnp.max(jnp.abs(out2 - ref2)))

    print("KERNEL_OK")
</pallas_src>

<mosaic_0001>
module attributes {stable_mosaic.version = 11 : i64} {
  func.func @kernel(%arg0: i32, %arg1: memref<16x32xbf16, #tpu.memory_space<vmem>>, %arg2: memref<32x32xbf16, #tpu.memory_space<vmem>>, %arg3: memref<1x32xf32, #tpu.memory_space<vmem>>, %arg4: memref<1x32xf32, #tpu.memory_space<vmem>>, %arg5: memref<1x32xf32, #tpu.memory_space<vmem>>, %arg6: memref<16x32xf32, #tpu.memory_space<vmem>>) attributes {dimension_semantics = [#tpu.dimension_semantics<parallel>], iteration_bounds = array<i64: 1>, scalar_prefetch = 0 : i64, scratch_operands = 0 : i64, tpu.core_type = #tpu.core_type<tc>, window_params = [{transform_indices = @transform_0, window_bounds = array<i64: 16, 32>}, {pipeline_mode = #tpu.pipeline_mode<synchronous>, transform_indices = @transform_1, window_bounds = array<i64: 32, 32>}, {pipeline_mode = #tpu.pipeline_mode<synchronous>, transform_indices = @transform_2, window_bounds = array<i64: 1, 32>}, {pipeline_mode = #tpu.pipeline_mode<synchronous>, transform_indices = @transform_3, window_bounds = array<i64: 1, 32>}, {pipeline_mode = #tpu.pipeline_mode<synchronous>, transform_indices = @transform_4, window_bounds = array<i64: 1, 32>}, {transform_indices = @transform_5, window_bounds = array<i64: 16, 32>}]} {
    %c0 = arith.constant 0 : index
    %c0_0 = arith.constant 0 : index
    %0 = vector.load %arg1[%c0, %c0_0] : memref<16x32xbf16, #tpu.memory_space<vmem>>, vector<16x32xbf16>
    %c0_1 = arith.constant 0 : index
    %c0_2 = arith.constant 0 : index
    %1 = vector.load %arg2[%c0_1, %c0_2] : memref<32x32xbf16, #tpu.memory_space<vmem>>, vector<32x32xbf16>
    %cst = arith.constant dense<0.000000e+00> : vector<16x32xf32>
    %2 = tpu.matmul %0, %1, %cst {dimension_numbers = #tpu.dot_dimension_numbers<[1], [0], [0], [1], [0, 0, 1, 1], [], []>} : vector<16x32xbf16>, vector<32x32xbf16>, vector<16x32xf32> -> vector<16x32xf32>
    %c0_3 = arith.constant 0 : index
    %c0_4 = arith.constant 0 : index
    %3 = vector.load %arg3[%c0_3, %c0_4] : memref<1x32xf32, #tpu.memory_space<vmem>>, vector<1x32xf32>
    %4 = vector.broadcast %3 : vector<1x32xf32> to vector<16x32xf32>
    %5 = arith.addf %2, %4 : vector<16x32xf32>
    %cst_5 = arith.constant 5.000000e-01 : f32
    %6 = vector.broadcast %cst_5 : f32 to vector<16x32xf32>
    %7 = arith.mulf %6, %5 : vector<16x32xf32>
    %cst_6 = arith.constant 0.707106769 : f32
    %8 = vector.broadcast %cst_6 : f32 to vector<16x32xf32>
    %9 = arith.mulf %5, %8 : vector<16x32xf32>
    %10 = math.erf %9 : vector<16x32xf32>
    %cst_7 = arith.constant 1.000000e+00 : f32
    %11 = vector.broadcast %cst_7 : f32 to vector<16x32xf32>
    %12 = arith.addf %11, %10 : vector<16x32xf32>
    %13 = arith.mulf %7, %12 : vector<16x32xf32>
    %cst_8 = arith.constant dense<0.000000e+00> : vector<16xf32>
    %14 = vector.multi_reduction <add>, %13, %cst_8 [1] : vector<16x32xf32> to vector<16xf32>
    %15 = vector.shape_cast %14 : vector<16xf32> to vector<16x1xf32>
    %cst_9 = arith.constant 3.200000e+01 : f32
    %16 = vector.broadcast %cst_9 : f32 to vector<16x1xf32>
    %17 = arith.divf %15, %16 : vector<16x1xf32>
    %18 = arith.mulf %13, %13 : vector<16x32xf32>
    %cst_10 = arith.constant dense<0.000000e+00> : vector<16xf32>
    %19 = vector.multi_reduction <add>, %18, %cst_10 [1] : vector<16x32xf32> to vector<16xf32>
    %20 = vector.shape_cast %19 : vector<16xf32> to vector<16x1xf32>
    %cst_11 = arith.constant 3.200000e+01 : f32
    %21 = vector.broadcast %cst_11 : f32 to vector<16x1xf32>
    %22 = arith.divf %20, %21 : vector<16x1xf32>
    %23 = arith.mulf %17, %17 : vector<16x1xf32>
    %24 = arith.subf %22, %23 : vector<16x1xf32>
    %cst_12 = arith.constant 0.000000e+00 : f32
    %25 = vector.broadcast %cst_12 : f32 to vector<16x1xf32>
    %26 = arith.maximumf %24, %25 : vector<16x1xf32>
    %27 = vector.broadcast %17 : vector<16x1xf32> to vector<16x32xf32>
    %28 = arith.subf %13, %27 : vector<16x32xf32>
    %cst_13 = arith.constant 9.99999996E-13 : f32
    %29 = vector.broadcast %cst_13 : f32 to vector<16x1xf32>
    %30 = arith.addf %26, %29 : vector<16x1xf32>
    %31 = math.rsqrt %30 : vector<16x1xf32>
    %32 = vector.broadcast %31 : vector<16x1xf32> to vector<16x32xf32>
    %33 = arith.mulf %28, %32 : vector<16x32xf32>
    %c0_14 = arith.constant 0 : index
    %c0_15 = arith.constant 0 : index
    %34 = vector.load %arg4[%c0_14, %c0_15] : memref<1x32xf32, #tpu.memory_space<vmem>>, vector<1x32xf32>
    %35 = vector.broadcast %34 : vector<1x32xf32> to vector<16x32xf32>
    %36 = arith.mulf %33, %35 : vector<16x32xf32>
    %c0_16 = arith.constant 0 : index
    %c0_17 = arith.constant 0 : index
    %37 = vector.load %arg5[%c0_16, %c0_17] : memref<1x32xf32, #tpu.memory_space<vmem>>, vector<1x32xf32>
    %38 = vector.broadcast %37 : vector<1x32xf32> to vector<16x32xf32>
    %39 = arith.addf %36, %38 : vector<16x32xf32>
    %c0_18 = arith.constant 0 : index
    %c0_19 = arith.constant 0 : index
    %40 = vector.load %arg6[%c0_18, %c0_19] : memref<16x32xf32, #tpu.memory_space<vmem>>, vector<16x32xf32>
    tpu.vector_store %arg6[%c0_18, %c0_19], %39 {strides = array<i32>} : memref<16x32xf32, #tpu.memory_space<vmem>>, vector<16x32xf32>,
    return
  }
  func.func @transform_0(%arg0: i32) -> (i32, i32) {
    %c0_i32 = arith.constant 0 : i32
    %c0_i32_0 = arith.constant 0 : i32
    return %arg0, %c0_i32 : i32, i32
  }
  func.func @transform_1(%arg0: i32) -> (i32, i32) {
    %c0_i32 = arith.constant 0 : i32
    %c0_i32_0 = arith.constant 0 : i32
    %c0_i32_1 = arith.constant 0 : i32
    return %c0_i32, %c0_i32_0 : i32, i32
  }
  func.func @transform_2(%arg0: i32) -> (i32, i32) {
    %c0_i32 = arith.constant 0 : i32
    %c0_i32_0 = arith.constant 0 : i32
    %c0_i32_1 = arith.constant 0 : i32
    return %c0_i32, %c0_i32_0 : i32, i32
  }
  func.func @transform_3(%arg0: i32) -> (i32, i32) {
    %c0_i32 = arith.constant 0 : i32
    %c0_i32_0 = arith.constant 0 : i32
    %c0_i32_1 = arith.constant 0 : i32
    return %c0_i32, %c0_i32_0 : i32, i32
  }
  func.func @transform_4(%arg0: i32) -> (i32, i32) {
    %c0_i32 = arith.constant 0 : i32
    %c0_i32_0 = arith.constant 0 : i32
    %c0_i32_1 = arith.constant 0 : i32
    return %c0_i32, %c0_i32_0 : i32, i32
  }
  func.func @transform_5(%arg0: i32) -> (i32, i32) {
    %c0_i32 = arith.constant 0 : i32
    %c0_i32_0 = arith.constant 0 : i32
    return %arg0, %c0_i32 : i32, i32
  }
}

module attributes {stable_mosaic.version = 11 : i64} {
  func.func @kernel(%arg0: i32, %arg1: memref<16x32xbf16, #tpu.memory_space<vmem>>, %arg2: memref<32x32xbf16, #tpu.memory_space<vmem>>, %arg3: memref<1x32xf32, #tpu.memory_space<vmem>>, %arg4: memref<1x32xf32, #tpu.memory_space<vmem>>, %arg5: memref<1x32xf32, #tpu.memory_space<vmem>>, %arg6: memref<16x32xf32, #tpu.memory_space<vmem>>) attributes {dimension_semantics = [#tpu.dimension_semantics<parallel>], iteration_bounds = array<i64: 1>, scalar_prefetch = 0 : i64, scratch_operands = 0 : i64, tpu.core_type = #tpu.core_type<tc>, window_params = [{transform_indices = @transform_0, window_bounds = array<i64: 16, 32>}, {pipeline_mode = #tpu.pipeline_mode<synchronous>, transform_indices = @transform_1, window_bounds = array<i64: 32, 32>}, {pipeline_mode = #tpu.pipeline_mode<synchronous>, transform_indices = @transform_2, window_bounds = array<i64: 1, 32>}, {pipeline_mode = #tpu.pipeline_mode<synchronous>, transform_indices = @transform_3, window_bounds = array<i64: 1, 32>}, {pipeline_mode = #tpu.pipeline_mode<synchronous>, transform_indices = @transform_4, window_bounds = array<i64: 1, 32>}, {transform_indices = @transform_5, window_bounds = array<i64: 16, 32>}]} {
    %c0 = arith.constant 0 : index
    %c0_0 = arith.constant 0 : index
    %0 = vector.load %arg1[%c0, %c0_0] : memref<16x32xbf16, #tpu.memory_space<vmem>>, vector<16x32xbf16>
    %c0_1 = arith.constant 0 : index
    %c0_2 = arith.constant 0 : index
    %1 = vector.load %arg2[%c0_1, %c0_2] : memref<32x32xbf16, #tpu.memory_space<vmem>>, vector<32x32xbf16>
    %cst = arith.constant dense<0.000000e+00> : vector<16x32xf32>
    %2 = tpu.matmul %0, %1, %cst {dimension_numbers = #tpu.dot_dimension_numbers<[1], [0], [0], [1], [0, 0, 1, 1], [], []>} : vector<16x32xbf16>, vector<32x32xbf16>, vector<16x32xf32> -> vector<16x32xf32>
    %c0_3 = arith.constant 0 : index
    %c0_4 = arith.constant 0 : index
    %3 = vector.load %arg3[%c0_3, %c0_4] : memref<1x32xf32, #tpu.memory_space<vmem>>, vector<1x32xf32>
    %4 = vector.broadcast %3 : vector<1x32xf32> to vector<16x32xf32>
    %5 = arith.addf %2, %4 : vector<16x32xf32>
    %cst_5 = arith.constant 5.000000e-01 : f32
    %6 = vector.broadcast %cst_5 : f32 to vector<16x32xf32>
    %7 = arith.mulf %6, %5 : vector<16x32xf32>
    %cst_6 = arith.constant 0.707106769 : f32
    %8 = vector.broadcast %cst_6 : f32 to vector<16x32xf32>
    %9 = arith.mulf %5, %8 : vector<16x32xf32>
    %10 = math.erf %9 : vector<16x32xf32>
    %cst_7 = arith.constant 1.000000e+00 : f32
    %11 = vector.broadcast %cst_7 : f32 to vector<16x32xf32>
    %12 = arith.addf %11, %10 : vector<16x32xf32>
    %13 = arith.mulf %7, %12 : vector<16x32xf32>
    %cst_8 = arith.constant dense<0.000000e+00> : vector<16xf32>
    %14 = vector.multi_reduction <add>, %13, %cst_8 [1] : vector<16x32xf32> to vector<16xf32>
    %15 = vector.shape_cast %14 : vector<16xf32> to vector<16x1xf32>
    %cst_9 = arith.constant 3.200000e+01 : f32
    %16 = vector.broadcast %cst_9 : f32 to vector<16x1xf32>
    %17 = arith.divf %15, %16 : vector<16x1xf32>
    %18 = arith.mulf %13, %13 : vector<16x32xf32>
    %cst_10 = arith.constant dense<0.000000e+00> : vector<16xf32>
    %19 = vector.multi_reduction <add>, %18, %cst_10 [1] : vector<16x32xf32> to vector<16xf32>
    %20 = vector.shape_cast %19 : vector<16xf32> to vector<16x1xf32>
    %cst_11 = arith.constant 3.200000e+01 : f32
    %21 = vector.broadcast %cst_11 : f32 to vector<16x1xf32>
    %22 = arith.divf %20, %21 : vector<16x1xf32>
    %23 = arith.mulf %17, %17 : vector<16x1xf32>
    %24 = arith.subf %22, %23 : vector<16x1xf32>
    %cst_12 = arith.constant 0.000000e+00 : f32
    %25 = vector.broadcast %cst_12 : f32 to vector<16x1xf32>
    %26 = arith.maximumf %24, %25 : vector<16x1xf32>
    %27 = vector.broadcast %17 : vector<16x1xf32> to vector<16x32xf32>
    %28 = arith.subf %13, %27 : vector<16x32xf32>
    %cst_13 = arith.constant 9.99999996E-13 : f32
    %29 = vector.broadcast %cst_13 : f32 to vector<16x1xf32>
    %30 = arith.addf %26, %29 : vector<16x1xf32>
    %31 = math.rsqrt %30 : vector<16x1xf32>
    %32 = vector.broadcast %31 : vector<16x1xf32> to vector<16x32xf32>
    %33 = arith.mulf %28, %32 : vector<16x32xf32>
    %c0_14 = arith.constant 0 : index
    %c0_15 = arith.constant 0 : index
    %34 = vector.load %arg4[%c0_14, %c0_15] : memref<1x32xf32, #tpu.memory_space<vmem>>, vector<1x32xf32>
    %35 = vector.broadcast %34 : vector<1x32xf32> to vector<16x32xf32>
    %36 = arith.mulf %33, %35 : vector<16x32xf32>
    %c0_16 = arith.constant 0 : index
    %c0_17 = arith.constant 0 : index
    %37 = vector.load %arg5[%c0_16, %c0_17] : memref<1x32xf32, #tpu.memory_space<vmem>>, vector<1x32xf32>
    %38 = vector.broadcast %37 : vector<1x32xf32> to vector<16x32xf32>
    %39 = arith.addf %36, %38 : vector<16x32xf32>
    %c0_18 = arith.constant 0 : index
    %c0_19 = arith.constant 0 : index
    %40 = vector.load %arg6[%c0_18, %c0_19] : memref<16x32xf32, #tpu.memory_space<vmem>>, vector<16x32xf32>
    tpu.vector_store %arg6[%c0_18, %c0_19], %39 {strides = array<i32>} : memref<16x32xf32, #tpu.memory_space<vmem>>, vector<16x32xf32>,
    return
  }
  func.func @transform_0(%arg0: i32) -> (i32, i32) {
    %c0_i32 = arith.constant 0 : i32
    %c0_i32_0 = arith.constant 0 : i32
    return %arg0, %c0_i32 : i32, i32
  }
  func.func @transform_1(%arg0: i32) -> (i32, i32) {
    %c0_i32 = arith.constant 0 : i32
    %c0_i32_0 = arith.constant 0 : i32
    %c0_i32_1 = arith.constant 0 : i32
    return %c0_i32, %c0_i32_0 : i32, i32
  }
  func.func @transform_2(%arg0: i32) -> (i32, i32) {
    %c0_i32 = arith.constant 0 : i32
    %c0_i32_0 = arith.constant 0 : i32
    %c0_i32_1 = arith.constant 0 : i32
    return %c0_i32, %c0_i32_0 : i32, i32
  }
  func.func @transform_3(%arg0: i32) -> (i32, i32) {
    %c0_i32 = arith.constant 0 : i32
    %c0_i32_0 = arith.constant 0 : i32
    %c0_i32_1 = arith.constant 0 : i32
    return %c0_i32, %c0_i32_0 : i32, i32
  }
  func.func @transform_4(%arg0: i32) -> (i32, i32) {
    %c0_i32 = arith.constant 0 : i32
    %c0_i32_0 = arith.constant 0 : i32
    %c0_i32_1 = arith.constant 0 : i32
    return %c0_i32, %c0_i32_0 : i32, i32
  }
  func.func @transform_5(%arg0: i32) -> (i32, i32) {
    %c0_i32 = arith.constant 0 : i32
    %c0_i32_0 = arith.constant 0 : i32
    return %arg0, %c0_i32 : i32, i32
  }
}

</mosaic_0001>

<llo_original>
// kernel: qbert_prediction_head_transform.1
$region0: #{qbert_prediction_head_transform.1}
  #allocation0 [shape = 'u32[]', space=smem, size = 0x4, offset = 0x4, fixed_abs, tag = 'smem constant byte address 0x4 - core index']
  #allocation1 [shape = 'u32[144,128]{1,0:T(1,128)}', space=vmem, size = 0x12000, scoped, tag = 'internal scratch']
  %s0 = inlined_call_operand.vmem [shape: bf16[16,32], index: 0, kind: input, shape index: {}]
  %s1 = inlined_call_operand.vmem [shape: bf16[32,32], index: 1, kind: input, shape index: {}]
  %s2 = inlined_call_operand.vmem [shape: f32[1,32], index: 2, kind: input, shape index: {}]
  %s3 = inlined_call_operand.vmem [shape: f32[1,32], index: 3, kind: input, shape index: {}]
  %s4 = inlined_call_operand.vmem [shape: f32[1,32], index: 4, kind: input, shape index: {}]
  %s5 = inlined_call_operand.hbm [shape: f32[16,32], index: 5, kind: output, shape index: {}]
  %s6 = sld [smem:[#allocation0]]
  $region30: #{qbert_prediction_head_transform.1} parent=0
    _
  %s8 = ssub.s32 1, %s6
  %s9 = scalar_select 0, %s8, %s6
  $region1: #{qbert_prediction_head_transform.1} parent=0
    #allocation2 [shape = 'u8[8192]{0}', space=vmem, size = 0x2000, scoped, tag = 'output window, operand 0, single buffered']
    #allocation3 [shape = 's32[1]{0}', space=sflag, size = 0x4, scoped, tag = 'scoped memory for qbert_prediction_head_transform.1']
    %10 = vsyncpa [#allocation3], 0
    // Predicated region
    $region2: #{qbert_prediction_head_transform.1} parent=1 // pred_check
      _
    $region3: #{qbert_prediction_head_transform.1} parent=1 // pred_check_branch
      %12 = sbr.rel (0) target = $region5
    $region4: #{qbert_prediction_head_transform.1} parent=1 // pred_region
      _
    $region5: #{qbert_prediction_head_transform.1} parent=1 // pred_fallthru
      _
    // Predicated region
    $region6: #{qbert_prediction_head_transform.1} parent=1 // pred_check
      _
    $region7: #{qbert_prediction_head_transform.1} parent=1 // pred_check_branch
      %14 = sbr.rel (0) target = $region9
    $region8: #{qbert_prediction_head_transform.1} parent=1 // pred_region
      _
    $region9: #{qbert_prediction_head_transform.1} parent=1 // pred_fallthru
      _
    // Predicated region
    $region10: #{qbert_prediction_head_transform.1} parent=1 // pred_check
      _
    $region11: #{qbert_prediction_head_transform.1} parent=1 // pred_check_branch
      %16 = sbr.rel (0) target = $region13
    $region12: #{qbert_prediction_head_transform.1} parent=1 // pred_region
      _
    $region13: #{qbert_prediction_head_transform.1} parent=1 // pred_fallthru
      _
    // Predicated region
    $region14: #{qbert_prediction_head_transform.1} parent=1 // pred_check
      _
    $region15: #{qbert_prediction_head_transform.1} parent=1 // pred_check_branch
      %18 = sbr.rel (0) target = $region17
    $region16: #{qbert_prediction_head_transform.1} parent=1 // pred_region
      _
    $region17: #{qbert_prediction_head_transform.1} parent=1 // pred_fallthru
      _
    // Predicated region
    $region18: #{qbert_prediction_head_transform.1} parent=1 // pred_check
      _
    $region19: #{qbert_prediction_head_transform.1} parent=1 // pred_check_branch
      %20 = sbr.rel (0) target = $region21
    $region20: #{qbert_prediction_head_transform.1} parent=1 // pred_region
      _
    $region21: #{qbert_prediction_head_transform.1} parent=1 // pred_fallthru
      _
    %v22 = vld [vmem:[%s0] sm:$0xf]
    %v23 = vld [vmem:[%s0 + $0x4] sm:$0xf]
    %v24 = vld [vmem:[%s1] sm:$0xf]
    %v25 = vld [vmem:[%s1 + $0x4] sm:$0xf]
    %v26 = vld [vmem:[%s1 + $0x8] sm:$0xf]
    %v27 = vld [vmem:[%s1 + $0xc] sm:$0xf]
    %v28 = vld [vmem:[%s2] sm:$0x1]
    %v30 = vlaneseq
    %v31 = vshrl.u32 %v30, 7
    %v32 = vsub.s32 0, %v31
    %v33 = vrot.slane %v28, %v32
    %v37 = vunpack.c.l.b16 %v22
    %v38 = vunpack.c.l.b16 %v23
    %v39 = vpack.c.b16 %v38, %v37
    %v44 = vunpack.c.l.b16 %v24
    %v45 = vunpack.c.l.b16 %v25
    %v46 = vunpack.c.l.b16 %v26
    %v47 = vunpack.c.l.b16 %v27
    %v48 = vpack.c.b16 %v45, %v44
    %v49 = vpack.c.b16 %v47, %v46
    %vm52 = vcmask 261120
    %v54 = vsel %vm52, %v39, 0
    %56 = vmatprep.subr.bf16.mxu0 0
    %57 = vmatpush1.bf16.msra.mxu0 0
    %58 = vmatprep.subr.bf16.mxu0 0
    %59 = vmatpush1.bf16.msra.mxu0 0
    %60 = vmatprep.subr.bf16.mxu0 0
    %61 = vmatpush1.bf16.msra.mxu0 0
    %62 = vmatprep.subr.bf16.mxu0 0
    %63 = vmatpush1.bf16.msra.mxu0 0
    %64 = vmatprep.subr.bf16.mxu0 0
    %65 = vmatpush1.bf16.msra.mxu0 0
    %66 = vmatprep.subr.bf16.mxu0 0
    %67 = vmatpush1.bf16.msra.mxu0 0
    %68 = vmatprep.subr.bf16.mxu0 0
    %69 = vmatpush1.bf16.msra.mxu0 %v49
    %70 = vmatprep.subr.bf16.mxu0 0
    %71 = vmatpush1.bf16.msra.mxu0 %v48
    %72 = vmatprep.subr.bf16.mxu0 0
    %73 = vmatpush2.bf16.msra.mxu0 0
    %74 = vmatprep.subr.bf16.mxu0 0
    %75 = vmatpush2.bf16.msra.mxu0 0
    %76 = vmatprep.subr.bf16.mxu0 0
    %77 = vmatpush2.bf16.msra.mxu0 0
    %78 = vmatprep.subr.bf16.mxu0 0
    %79 = vmatpush2.bf16.msra.mxu0 0
    %80 = vmatprep.subr.bf16.mxu0 0
    %81 = vmatpush2.bf16.msra.mxu0 0
    %82 = vmatprep.subr.bf16.mxu0 0
    %83 = vmatpush2.bf16.msra.mxu0 0
    %84 = vmatprep.subr.bf16.mxu0 0
    %85 = vmatpush2.bf16.msra.mxu0 0
    %86 = vmatprep.subr.bf16.mxu0 0
    %87 = vmatpush2.bf16.msra.mxu0 0
    %88 = vmatprep.mubr.bf16.mxu0 0
    %89 = vmatmul.mubr.bf16.gmra.mxu0 %v54
    %v90 = vpop.f32.mrf.mxu0
    %v91 = vadd.f32 %v33, %v90
    %v92 = vpop.f32.mrf.mxu0
    %v93 = vpop.f32.mrf.mxu0
    %v94 = vadd.f32 %v33, %v93
    %v95 = vpop.f32.mrf.mxu0
    %96 = vdwg.mxu0
    %v97 = vmul.f32 %v91, 0.5
    %v98 = vmul.f32 %v94, 0.5
    %v99 = vmul.f32 %v91, 0.70710677
    %v100 = vmul.f32 %v94, 0.70710677
    %v101 = verf.f32.pop %v99
    %v102 = verf.f32.pop %v100
    %v103 = vadd.f32 %v101, 1.0
    %v104 = vadd.f32 %v102, 1.0
    %v105 = vmul.f32 %v97, %v103
    %v106 = vmul.f32 %v98, %v104
    %v107 = vsel %vm52, %v105, 0.0
    %108 = vadd.xlane.f32.xlu0 %v107
    %v109 = vpop.xlane.xlu0 %108
    %v110 = vsel %vm52, %v106, 0.0
    %111 = vadd.xlane.f32.xlu0 %v110
    %v112 = vpop.xlane.xlu0 %111
    %v113 = vrcp.pop 32.0
    %v114 = vmul.f32 %v109, %v113
    %v115 = vmul.f32 %v112, %v113
    %v116 = vmul.f32 %v105, %v105
    %v117 = vmul.f32 %v106, %v106
    %v118 = vsel %vm52, %v116, 0.0
    %119 = vadd.xlane.f32.xlu0 %v118
    %v120 = vpop.xlane.xlu0 %119
    %v121 = vsel %vm52, %v117, 0.0
    %122 = vadd.xlane.f32.xlu0 %v121
    %v123 = vpop.xlane.xlu0 %122
    %v124 = vmul.f32 %v120, %v113
    %v125 = vmul.f32 %v123, %v113
    %v126 = vmul.f32 %v114, %v114
    %v127 = vmul.f32 %v115, %v115
    %v128 = vsub.f32 %v124, %v126
    %v129 = vsub.f32 %v125, %v127
    %v130 = vmax.f32 %v128, 0.0
    %v131 = vmax.f32 %v129, 0.0
    %v132 = vsub.f32 %v105, %v114
    %v133 = vsub.f32 %v106, %v115
    %v134 = vadd.f32 %v130, 1e-12
    %v135 = vadd.f32 %v131, 1e-12
    %v136 = vrsqrt.pop %v134
    %v137 = vrsqrt.pop %v135
    %v138 = vmul.f32 %v132, %v136
    %v139 = vmul.f32 %v133, %v137
    %v140 = vld [vmem:[%s3] sm:$0x1]
    %v142 = vlaneseq
    %v143 = vshrl.u32 %v142, 7
    %v144 = vsub.s32 0, %v143
    %v145 = vrot.slane %v140, %v144
    %v147 = vmul.f32 %v138, %v145
    %v148 = vmul.f32 %v139, %v145
    %v149 = vld [vmem:[%s4] sm:$0x1]
    %v151 = vlaneseq
    %v152 = vshrl.u32 %v151, 7
    %v153 = vsub.s32 0, %v152
    %v154 = vrot.slane %v149, %v153
    %v156 = vadd.f32 %v147, %v154
    %v157 = vadd.f32 %v148, %v154
    %158 = vst.msk [vmem:[#allocation2] sm:$0xff] %vm52, %v156
    %159 = vst.msk [vmem:[#allocation2 + $0x8] sm:$0xff] %vm52, %v157
    // Predicated region
    $region22: #{qbert_prediction_head_transform.1} parent=1 // pred_check
      _
    $region23: #{qbert_prediction_head_transform.1} parent=1 // pred_check_branch
      %161 = sbr.rel (0) target = $region25
    $region24: #{qbert_prediction_head_transform.1} parent=1 // pred_region
      %s163 = ssub.s32 256, 256
      %164 = vsyncadd [#allocation3], %s163
      %s165 = sshll.u32 [#allocation2], 4
      %s166 = int_to_ptr.vmem [resolvable:$true] %s165
      %171 = dma.vmem_to_hbm [thread:$0]  %s166, 256, %s5, [#allocation3], 128, 128, 8
    $region25: #{qbert_prediction_head_transform.1} parent=1 // pred_fallthru
      _
    // Predicated region
    $region26: #{qbert_prediction_head_transform.1} parent=1 // pred_check
      _
    $region27: #{qbert_prediction_head_transform.1} parent=1 // pred_check_branch
      %173 = sbr.rel (0) target = $region29
    $region28: #{qbert_prediction_head_transform.1} parent=1 // pred_region
      %174 = dma.done [#allocation3], 256
    $region29: #{qbert_prediction_head_transform.1} parent=1 // pred_fallthru
      _
    %175 = vsyncpa [#allocation3], 1

// kernel: qbert_prediction_head_transform.1
$region0: #{qbert_prediction_head_transform.1}
  #allocation0 [shape = 'u32[]', space=smem, size = 0x4, offset = 0x4, fixed_abs, tag = 'smem constant byte address 0x4 - core index']
  #allocation1 [shape = 'u32[144,128]{1,0:T(1,128)}', space=vmem, size = 0x12000, scoped, tag = 'internal scratch']
  %s0 = inlined_call_operand.vmem [shape: bf16[16,32], index: 0, kind: input, shape index: {}]
  %s1 = inlined_call_operand.vmem [shape: bf16[32,32], index: 1, kind: input, shape index: {}]
  %s2 = inlined_call_operand.vmem [shape: f32[1,32], index: 2, kind: input, shape index: {}]
  %s3 = inlined_call_operand.vmem [shape: f32[1,32], index: 3, kind: input, shape index: {}]
  %s4 = inlined_call_operand.vmem [shape: f32[1,32], index: 4, kind: input, shape index: {}]
  %s5 = inlined_call_operand.hbm [shape: f32[16,32], index: 5, kind: output, shape index: {}]
  %s6 = sld [smem:[#allocation0]]
  $region30: #{qbert_prediction_head_transform.1} parent=0
    _
  %s8 = ssub.s32 1, %s6
  %s9 = scalar_select 0, %s8, %s6
  $region1: #{qbert_prediction_head_transform.1} parent=0
    #allocation2 [shape = 'u8[8192]{0}', space=vmem, size = 0x2000, scoped, tag = 'output window, operand 0, single buffered']
    #allocation3 [shape = 's32[1]{0}', space=sflag, size = 0x4, scoped, tag = 'scoped memory for qbert_prediction_head_transform.1']
    %10 = vsyncpa [#allocation3], 0
    // Predicated region
    $region2: #{qbert_prediction_head_transform.1} parent=1 // pred_check
      _
    $region3: #{qbert_prediction_head_transform.1} parent=1 // pred_check_branch
      %12 = sbr.rel (0) target = $region5
    $region4: #{qbert_prediction_head_transform.1} parent=1 // pred_region
      _
    $region5: #{qbert_prediction_head_transform.1} parent=1 // pred_fallthru
      _
    // Predicated region
    $region6: #{qbert_prediction_head_transform.1} parent=1 // pred_check
      _
    $region7: #{qbert_prediction_head_transform.1} parent=1 // pred_check_branch
      %14 = sbr.rel (0) target = $region9
    $region8: #{qbert_prediction_head_transform.1} parent=1 // pred_region
      _
    $region9: #{qbert_prediction_head_transform.1} parent=1 // pred_fallthru
      _
    // Predicated region
    $region10: #{qbert_prediction_head_transform.1} parent=1 // pred_check
      _
    $region11: #{qbert_prediction_head_transform.1} parent=1 // pred_check_branch
      %16 = sbr.rel (0) target = $region13
    $region12: #{qbert_prediction_head_transform.1} parent=1 // pred_region
      _
    $region13: #{qbert_prediction_head_transform.1} parent=1 // pred_fallthru
      _
    // Predicated region
    $region14: #{qbert_prediction_head_transform.1} parent=1 // pred_check
      _
    $region15: #{qbert_prediction_head_transform.1} parent=1 // pred_check_branch
      %18 = sbr.rel (0) target = $region17
    $region16: #{qbert_prediction_head_transform.1} parent=1 // pred_region
      _
    $region17: #{qbert_prediction_head_transform.1} parent=1 // pred_fallthru
      _
    // Predicated region
    $region18: #{qbert_prediction_head_transform.1} parent=1 // pred_check
      _
    $region19: #{qbert_prediction_head_transform.1} parent=1 // pred_check_branch
      %20 = sbr.rel (0) target = $region21
    $region20: #{qbert_prediction_head_transform.1} parent=1 // pred_region
      _
    $region21: #{qbert_prediction_head_transform.1} parent=1 // pred_fallthru
      _
    %v22 = vld [vmem:[%s0] sm:$0xf]
    %v23 = vld [vmem:[%s0 + $0x4] sm:$0xf]
    %v24 = vld [vmem:[%s1] sm:$0xf]
    %v25 = vld [vmem:[%s1 + $0x4] sm:$0xf]
    %v26 = vld [vmem:[%s1 + $0x8] sm:$0xf]
    %v27 = vld [vmem:[%s1 + $0xc] sm:$0xf]
    %v28 = vld [vmem:[%s2] sm:$0x1]
    %v30 = vlaneseq
    %v31 = vshrl.u32 %v30, 7
    %v32 = vsub.s32 0, %v31
    %v33 = vrot.slane %v28, %v32
    %v37 = vunpack.c.l.b16 %v22
    %v38 = vunpack.c.l.b16 %v23
    %v39 = vpack.c.b16 %v38, %v37
    %v44 = vunpack.c.l.b16 %v24
    %v45 = vunpack.c.l.b16 %v25
    %v46 = vunpack.c.l.b16 %v26
    %v47 = vunpack.c.l.b16 %v27
    %v48 = vpack.c.b16 %v45, %v44
    %v49 = vpack.c.b16 %v47, %v46
    %vm52 = vcmask 261120
    %v54 = vsel %vm52, %v39, 0
    %56 = vmatprep.subr.bf16.mxu0 0
    %57 = vmatpush1.bf16.msra.mxu0 0
    %58 = vmatprep.subr.bf16.mxu0 0
    %59 = vmatpush1.bf16.msra.mxu0 0
    %60 = vmatprep.subr.bf16.mxu0 0
    %61 = vmatpush1.bf16.msra.mxu0 0
    %62 = vmatprep.subr.bf16.mxu0 0
    %63 = vmatpush1.bf16.msra.mxu0 0
    %64 = vmatprep.subr.bf16.mxu0 0
    %65 = vmatpush1.bf16.msra.mxu0 0
    %66 = vmatprep.subr.bf16.mxu0 0
    %67 = vmatpush1.bf16.msra.mxu0 0
    %68 = vmatprep.subr.bf16.mxu0 0
    %69 = vmatpush1.bf16.msra.mxu0 %v49
    %70 = vmatprep.subr.bf16.mxu0 0
    %71 = vmatpush1.bf16.msra.mxu0 %v48
    %72 = vmatprep.subr.bf16.mxu0 0
    %73 = vmatpush2.bf16.msra.mxu0 0
    %74 = vmatprep.subr.bf16.mxu0 0
    %75 = vmatpush2.bf16.msra.mxu0 0
    %76 = vmatprep.subr.bf16.mxu0 0
    %77 = vmatpush2.bf16.msra.mxu0 0
    %78 = vmatprep.subr.bf16.mxu0 0
    %79 = vmatpush2.bf16.msra.mxu0 0
    %80 = vmatprep.subr.bf16.mxu0 0
    %81 = vmatpush2.bf16.msra.mxu0 0
    %82 = vmatprep.subr.bf16.mxu0 0
    %83 = vmatpush2.bf16.msra.mxu0 0
    %84 = vmatprep.subr.bf16.mxu0 0
    %85 = vmatpush2.bf16.msra.mxu0 0
    %86 = vmatprep.subr.bf16.mxu0 0
    %87 = vmatpush2.bf16.msra.mxu0 0
    %88 = vmatprep.mubr.bf16.mxu0 0
    %89 = vmatmul.mubr.bf16.gmra.mxu0 %v54
    %v90 = vpop.f32.mrf.mxu0
    %v91 = vadd.f32 %v33, %v90
    %v92 = vpop.f32.mrf.mxu0
    %v93 = vpop.f32.mrf.mxu0
    %v94 = vadd.f32 %v33, %v93
    %v95 = vpop.f32.mrf.mxu0
    %96 = vdwg.mxu0
    %v97 = vmul.f32 %v91, 0.5
    %v98 = vmul.f32 %v94, 0.5
    %v99 = vmul.f32 %v91, 0.70710677
    %v100 = vmul.f32 %v94, 0.70710677
    %v101 = verf.f32.pop %v99
    %v102 = verf.f32.pop %v100
    %v103 = vadd.f32 %v101, 1.0
    %v104 = vadd.f32 %v102, 1.0
    %v105 = vmul.f32 %v97, %v103
    %v106 = vmul.f32 %v98, %v104
    %v107 = vsel %vm52, %v105, 0.0
    %108 = vadd.xlane.f32.xlu0 %v107
    %v109 = vpop.xlane.xlu0 %108
    %v110 = vsel %vm52, %v106, 0.0
    %111 = vadd.xlane.f32.xlu0 %v110
    %v112 = vpop.xlane.xlu0 %111
    %v113 = vrcp.pop 32.0
    %v114 = vmul.f32 %v109, %v113
    %v115 = vmul.f32 %v112, %v113
    %v116 = vmul.f32 %v105, %v105
    %v117 = vmul.f32 %v106, %v106
    %v118 = vsel %vm52, %v116, 0.0
    %119 = vadd.xlane.f32.xlu0 %v118
    %v120 = vpop.xlane.xlu0 %119
    %v121 = vsel %vm52, %v117, 0.0
    %122 = vadd.xlane.f32.xlu0 %v121
    %v123 = vpop.xlane.xlu0 %122
    %v124 = vmul.f32 %v120, %v113
    %v125 = vmul.f32 %v123, %v113
    %v126 = vmul.f32 %v114, %v114
    %v127 = vmul.f32 %v115, %v115
    %v128 = vsub.f32 %v124, %v126
    %v129 = vsub.f32 %v125, %v127
    %v130 = vmax.f32 %v128, 0.0
    %v131 = vmax.f32 %v129, 0.0
    %v132 = vsub.f32 %v105, %v114
    %v133 = vsub.f32 %v106, %v115
    %v134 = vadd.f32 %v130, 1e-12
    %v135 = vadd.f32 %v131, 1e-12
    %v136 = vrsqrt.pop %v134
    %v137 = vrsqrt.pop %v135
    %v138 = vmul.f32 %v132, %v136
    %v139 = vmul.f32 %v133, %v137
    %v140 = vld [vmem:[%s3] sm:$0x1]
    %v142 = vlaneseq
    %v143 = vshrl.u32 %v142, 7
    %v144 = vsub.s32 0, %v143
    %v145 = vrot.slane %v140, %v144
    %v147 = vmul.f32 %v138, %v145
    %v148 = vmul.f32 %v139, %v145
    %v149 = vld [vmem:[%s4] sm:$0x1]
    %v151 = vlaneseq
    %v152 = vshrl.u32 %v151, 7
    %v153 = vsub.s32 0, %v152
    %v154 = vrot.slane %v149, %v153
    %v156 = vadd.f32 %v147, %v154
    %v157 = vadd.f32 %v148, %v154
    %158 = vst.msk [vmem:[#allocation2] sm:$0xff] %vm52, %v156
    %159 = vst.msk [vmem:[#allocation2 + $0x8] sm:$0xff] %vm52, %v157
    // Predicated region
    $region22: #{qbert_prediction_head_transform.1} parent=1 // pred_check
      _
    $region23: #{qbert_prediction_head_transform.1} parent=1 // pred_check_branch
      %161 = sbr.rel (0) target = $region25
    $region24: #{qbert_prediction_head_transform.1} parent=1 // pred_region
      %s163 = ssub.s32 256, 256
      %164 = vsyncadd [#allocation3], %s163
      %s165 = sshll.u32 [#allocation2], 4
      %s166 = int_to_ptr.vmem [resolvable:$true] %s165
      %171 = dma.vmem_to_hbm [thread:$0]  %s166, 256, %s5, [#allocation3], 128, 128, 8
    $region25: #{qbert_prediction_head_transform.1} parent=1 // pred_fallthru
      _
    // Predicated region
    $region26: #{qbert_prediction_head_transform.1} parent=1 // pred_check
      _
    $region27: #{qbert_prediction_head_transform.1} parent=1 // pred_check_branch
      %173 = sbr.rel (0) target = $region29
    $region28: #{qbert_prediction_head_transform.1} parent=1 // pred_region
      %174 = dma.done [#allocation3], 256
    $region29: #{qbert_prediction_head_transform.1} parent=1 // pred_fallthru
      _
    %175 = vsyncpa [#allocation3], 1

</llo_original>
